<compile_context>
chip_gen: v6e
topology: v6e:2x2x1
jax: 0.10.0
libtpu: 0.0.40
codegen_flags: <defaults>
</compile_context>

<pallas_src>
import jax
import jax.numpy as jnp
import numpy as np
from jax.experimental import pallas as pl
from jax.experimental.pallas import tpu as pltpu


# ---------------------------------------------------------------------------
# Fused 3-layer MLP kernel:
#   y = relu(relu(x@W1x + a@W1a + b1) @ W2 + b2) . w3 + b3
# ---------------------------------------------------------------------------
def _critic_kernel(x_ref, a_ref,
                   w1x_ref, w1a_ref, b1_ref,
                   w2_ref, b2_ref,
                   w3t_ref, b3_ref,
                   out_ref):
    # Layer 1: cat(x, a) @ W1 + b1 == x @ W1x + a @ W1a + b1 (no lane concat).
    # MXU operands in bf16, f32 accumulation; bias/ReLU on the VPU in f32.
    h = (jnp.dot(x_ref[...].astype(jnp.bfloat16), w1x_ref[...],
                 preferred_element_type=jnp.float32)
         + jnp.dot(a_ref[...].astype(jnp.bfloat16), w1a_ref[...],
                   preferred_element_type=jnp.float32)
         + b1_ref[...])
    h = jnp.maximum(h, 0.0)

    # Layer 2 (dominant 256x256 matmul): bf16 operands, f32 accumulate.
    h = jnp.dot(h.astype(jnp.bfloat16), w2_ref[...],
                preferred_element_type=jnp.float32) + b2_ref[...]
    h = jnp.maximum(h, 0.0)

    # Layer 3 (scalar head, N=1): a (Bb,256)x(256,1) matmul would use 1/256 of the
    # MXU output lanes, so do it as a VPU multiply + XLU lane reduction instead.
    out_ref[...] = (jnp.sum(h * w3t_ref[...], axis=-1, keepdims=True)
                    + b3_ref[...])


def _round_up(v, m):
    return ((v + m - 1) // m) * m


def critic_forward(params, x, a, *, block_b=512):
    """Pallas forward for Critic.  x: (B, latent_dim), a: (B, action_dim) -> (B, 1)."""
    B, L = x.shape
    A = a.shape[1]

    if B <= 8:
        bb = B                                        # single step, block == full array
    else:
        # >= 2 grid steps so both v7x TensorCores get work on the "parallel" axis;
        # batch tile is a multiple of 8 sublanes and capped at block_b.
        bb = min(block_b, _round_up(pl.cdiv(B, 2), 8))
    grid = (pl.cdiv(B, bb),)                          # ragged last block, no wrapper pad

    const2d = lambda arr: pl.BlockSpec(arr.shape, lambda i: (0, 0))

    return pl.pallas_call(
        _critic_kernel,
        out_shape=jax.ShapeDtypeStruct((B, 1), jnp.float32),
        grid=grid,
        in_specs=[
            pl.BlockSpec((bb, L), lambda i: (i, 0)),
            pl.BlockSpec((bb, A), lambda i: (i, 0)),
            const2d(params["w1x"]), const2d(params["w1a"]), const2d(params["b1"]),
            const2d(params["w2"]), const2d(params["b2"]),
            const2d(params["w3t"]), const2d(params["b3"]),
        ],
        out_specs=pl.BlockSpec((bb, 1), lambda i: (i, 0)),
        compiler_params=pltpu.CompilerParams(dimension_semantics=("parallel",)),
    )(x, a,
      params["w1x"], params["w1a"], params["b1"],
      params["w2"], params["b2"],
      params["w3t"], params["b3"])


# ---------------------------------------------------------------------------
# Deterministic parameter init (synthetic weights; layout is [in, out] so the
# kernel computes y = x @ W + b, equivalent to torch nn.Linear).
# MXU weights stored in bf16; biases and the VPU-only head weight in f32.
# ---------------------------------------------------------------------------
def init_params(key, latent_dim, action_dim, hidden=256):
    k1, k2, k3, k4 = jax.random.split(key, 4)
    lin = lambda k, shape: 0.02 * jax.random.normal(k, shape, jnp.float32)
    return {
        "w1x": lin(k1, (latent_dim, hidden)).astype(jnp.bfloat16),
        "w1a": lin(k2, (action_dim, hidden)).astype(jnp.bfloat16),
        "b1": jnp.zeros((1, hidden), jnp.float32),
        "w2": lin(k3, (hidden, hidden)).astype(jnp.bfloat16),
        "b2": jnp.zeros((1, hidden), jnp.float32),
        "w3t": lin(k4, (1, hidden)),                 # layer-3 weight, transposed, f32
        "b3": jnp.zeros((1, 1), jnp.float32),
    }


# ---------------------------------------------------------------------------
# Pure-JAX f32 reference (mirrors the torch module exactly, including the concat).
# ---------------------------------------------------------------------------
def critic_reference(params, x, a):
    w1 = jnp.concatenate([params["w1x"], params["w1a"]], axis=0).astype(jnp.float32)
    h = jax.nn.relu(jnp.concatenate([x, a], axis=-1) @ w1 + params["b1"])
    h = jax.nn.relu(h @ params["w2"].astype(jnp.float32) + params["b2"])
    return h @ params["w3t"].T + params["b3"]


if __name__ == "__main__":
    latent_dim, action_dim = 16, 8

    key = jax.random.PRNGKey(0)
    kp, kx, ka, kx2, ka2 = jax.random.split(key, 5)
    params = init_params(kp, latent_dim, action_dim)

    # Small-batch case (single grid step, block == full array).
    B = 2
    x = jax.random.normal(kx, (B, latent_dim), jnp.float32)
    a = jax.random.normal(ka, (B, action_dim), jnp.float32)
    y = critic_forward(params, x, a)
    jax.block_until_ready(y)
    y_ref = critic_reference(params, x, a)
    np.testing.assert_allclose(np.asarray(y), np.asarray(y_ref), rtol=5e-2, atol=1e-3)
    assert y.shape == (B, 1)

    # Larger batch: exercises the ragged cdiv grid (2 parallel steps, no wrapper pad).
    B2 = 520
    x2 = jax.random.normal(kx2, (B2, latent_dim), jnp.float32)
    a2 = jax.random.normal(ka2, (B2, action_dim), jnp.float32)
    y2 = critic_forward(params, x2, a2)
    jax.block_until_ready(y2)
    y2_ref = critic_reference(params, x2, a2)
    np.testing.assert_allclose(np.asarray(y2), np.asarray(y2_ref), rtol=5e-2, atol=1e-3)
    assert y2.shape == (B2, 1)

    print("KERNEL_OK")
</pallas_src>

<mosaic_0001>
module attributes {stable_mosaic.version = 11 : i64} {
  func.func @_critic_kernel(%arg0: i32, %arg1: memref<2x16xf32, #tpu.memory_space<vmem>>, %arg2: memref<2x8xf32, #tpu.memory_space<vmem>>, %arg3: memref<16x256xbf16, #tpu.memory_space<vmem>>, %arg4: memref<8x256xbf16, #tpu.memory_space<vmem>>, %arg5: memref<1x256xf32, #tpu.memory_space<vmem>>, %arg6: memref<256x256xbf16, #tpu.memory_space<vmem>>, %arg7: memref<1x256xf32, #tpu.memory_space<vmem>>, %arg8: memref<1x256xf32, #tpu.memory_space<vmem>>, %arg9: memref<1x1xf32, #tpu.memory_space<vmem>>, %arg10: memref<2x1xf32, #tpu.memory_space<vmem>>) attributes {dimension_semantics = [#tpu.dimension_semantics<parallel>], iteration_bounds = array<i64: 1>, scalar_prefetch = 0 : i64, scratch_operands = 0 : i64, tpu.core_type = #tpu.core_type<tc>, window_params = [{transform_indices = @transform_0, window_bounds = array<i64: 2, 16>}, {transform_indices = @transform_1, window_bounds = array<i64: 2, 8>}, {pipeline_mode = #tpu.pipeline_mode<synchronous>, transform_indices = @transform_2, window_bounds = array<i64: 16, 256>}, {pipeline_mode = #tpu.pipeline_mode<synchronous>, transform_indices = @transform_3, window_bounds = array<i64: 8, 256>}, {pipeline_mode = #tpu.pipeline_mode<synchronous>, transform_indices = @transform_4, window_bounds = array<i64: 1, 256>}, {pipeline_mode = #tpu.pipeline_mode<synchronous>, transform_indices = @transform_5, window_bounds = array<i64: 256, 256>}, {pipeline_mode = #tpu.pipeline_mode<synchronous>, transform_indices = @transform_6, window_bounds = array<i64: 1, 256>}, {pipeline_mode = #tpu.pipeline_mode<synchronous>, transform_indices = @transform_7, window_bounds = array<i64: 1, 256>}, {pipeline_mode = #tpu.pipeline_mode<synchronous>, transform_indices = @transform_8, window_bounds = array<i64: 1, 1>}, {transform_indices = @transform_9, window_bounds = array<i64: 2, 1>}]} {
    %c0 = arith.constant 0 : index
    %c0_0 = arith.constant 0 : index
    %0 = vector.load %arg1[%c0, %c0_0] : memref<2x16xf32, #tpu.memory_space<vmem>>, vector<2x16xf32>
    %1 = arith.truncf %0 : vector<2x16xf32> to vector<2x16xbf16>
    %c0_1 = arith.constant 0 : index
    %c0_2 = arith.constant 0 : index
    %2 = vector.load %arg3[%c0_1, %c0_2] : memref<16x256xbf16, #tpu.memory_space<vmem>>, vector<16x256xbf16>
    %cst = arith.constant dense<0.000000e+00> : vector<2x256xf32>
    %3 = tpu.matmul %1, %2, %cst {dimension_numbers = #tpu.dot_dimension_numbers<[1], [0], [0], [1], [0, 0, 1, 1], [], []>} : vector<2x16xbf16>, vector<16x256xbf16>, vector<2x256xf32> -> vector<2x256xf32>
    %c0_3 = arith.constant 0 : index
    %c0_4 = arith.constant 0 : index
    %4 = vector.load %arg2[%c0_3, %c0_4] : memref<2x8xf32, #tpu.memory_space<vmem>>, vector<2x8xf32>
    %5 = arith.truncf %4 : vector<2x8xf32> to vector<2x8xbf16>
    %c0_5 = arith.constant 0 : index
    %c0_6 = arith.constant 0 : index
    %6 = vector.load %arg4[%c0_5, %c0_6] : memref<8x256xbf16, #tpu.memory_space<vmem>>, vector<8x256xbf16>
    %cst_7 = arith.constant dense<0.000000e+00> : vector<2x256xf32>
    %7 = tpu.matmul %5, %6, %cst_7 {dimension_numbers = #tpu.dot_dimension_numbers<[1], [0], [0], [1], [0, 0, 1, 1], [], []>} : vector<2x8xbf16>, vector<8x256xbf16>, vector<2x256xf32> -> vector<2x256xf32>
    %8 = arith.addf %3, %7 : vector<2x256xf32>
    %c0_8 = arith.constant 0 : index
    %c0_9 = arith.constant 0 : index
    %9 = vector.load %arg5[%c0_8, %c0_9] : memref<1x256xf32, #tpu.memory_space<vmem>>, vector<1x256xf32>
    %10 = vector.broadcast %9 : vector<1x256xf32> to vector<2x256xf32>
    %11 = arith.addf %8, %10 : vector<2x256xf32>
    %cst_10 = arith.constant 0.000000e+00 : f32
    %12 = vector.broadcast %cst_10 : f32 to vector<2x256xf32>
    %13 = arith.maximumf %11, %12 : vector<2x256xf32>
    %14 = arith.truncf %13 : vector<2x256xf32> to vector<2x256xbf16>
    %c0_11 = arith.constant 0 : index
    %c0_12 = arith.constant 0 : index
    %15 = vector.load %arg6[%c0_11, %c0_12] : memref<256x256xbf16, #tpu.memory_space<vmem>>, vector<256x256xbf16>
    %cst_13 = arith.constant dense<0.000000e+00> : vector<2x256xf32>
    %16 = tpu.matmul %14, %15, %cst_13 {dimension_numbers = #tpu.dot_dimension_numbers<[1], [0], [0], [1], [0, 0, 1, 1], [], []>} : vector<2x256xbf16>, vector<256x256xbf16>, vector<2x256xf32> -> vector<2x256xf32>
    %c0_14 = arith.constant 0 : index
    %c0_15 = arith.constant 0 : index
    %17 = vector.load %arg7[%c0_14, %c0_15] : memref<1x256xf32, #tpu.memory_space<vmem>>, vector<1x256xf32>
    %18 = vector.broadcast %17 : vector<1x256xf32> to vector<2x256xf32>
    %19 = arith.addf %16, %18 : vector<2x256xf32>
    %cst_16 = arith.constant 0.000000e+00 : f32
    %20 = vector.broadcast %cst_16 : f32 to vector<2x256xf32>
    %21 = arith.maximumf %19, %20 : vector<2x256xf32>
    %c0_17 = arith.constant 0 : index
    %c0_18 = arith.constant 0 : index
    %22 = vector.load %arg8[%c0_17, %c0_18] : memref<1x256xf32, #tpu.memory_space<vmem>>, vector<1x256xf32>
    %23 = vector.broadcast %22 : vector<1x256xf32> to vector<2x256xf32>
    %24 = arith.mulf %21, %23 : vector<2x256xf32>
    %cst_19 = arith.constant dense<0.000000e+00> : vector<2xf32>
    %25 = vector.multi_reduction <add>, %24, %cst_19 [1] : vector<2x256xf32> to vector<2xf32>
    %26 = vector.shape_cast %25 : vector<2xf32> to vector<2x1xf32>
    %c0_20 = arith.constant 0 : index
    %c0_21 = arith.constant 0 : index
    %27 = vector.load %arg9[%c0_20, %c0_21] : memref<1x1xf32, #tpu.memory_space<vmem>>, vector<1x1xf32>
    %28 = vector.broadcast %27 : vector<1x1xf32> to vector<2x1xf32>
    %29 = arith.addf %26, %28 : vector<2x1xf32>
    %c0_22 = arith.constant 0 : index
    %c0_23 = arith.constant 0 : index
    %30 = vector.load %arg10[%c0_22, %c0_23] : memref<2x1xf32, #tpu.memory_space<vmem>>, vector<2x1xf32>
    tpu.vector_store %arg10[%c0_22, %c0_23], %29 {strides = array<i32>} : memref<2x1xf32, #tpu.memory_space<vmem>>, vector<2x1xf32>,
    return
  }
  func.func @transform_0(%arg0: i32) -> (i32, i32) {
    %c0_i32 = arith.constant 0 : i32
    %c0_i32_0 = arith.constant 0 : i32
    return %arg0, %c0_i32 : i32, i32
  }
  func.func @transform_1(%arg0: i32) -> (i32, i32) {
    %c0_i32 = arith.constant 0 : i32
    %c0_i32_0 = arith.constant 0 : i32
    return %arg0, %c0_i32 : i32, i32
  }
  func.func @transform_2(%arg0: i32) -> (i32, i32) {
    %c0_i32 = arith.constant 0 : i32
    %c0_i32_0 = arith.constant 0 : i32
    %c0_i32_1 = arith.constant 0 : i32
    return %c0_i32, %c0_i32_0 : i32, i32
  }
  func.func @transform_3(%arg0: i32) -> (i32, i32) {
    %c0_i32 = arith.constant 0 : i32
    %c0_i32_0 = arith.constant 0 : i32
    %c0_i32_1 = arith.constant 0 : i32
    return %c0_i32, %c0_i32_0 : i32, i32
  }
  func.func @transform_4(%arg0: i32) -> (i32, i32) {
    %c0_i32 = arith.constant 0 : i32
    %c0_i32_0 = arith.constant 0 : i32
    %c0_i32_1 = arith.constant 0 : i32
    return %c0_i32, %c0_i32_0 : i32, i32
  }
  func.func @transform_5(%arg0: i32) -> (i32, i32) {
    %c0_i32 = arith.constant 0 : i32
    %c0_i32_0 = arith.constant 0 : i32
    %c0_i32_1 = arith.constant 0 : i32
    return %c0_i32, %c0_i32_0 : i32, i32
  }
  func.func @transform_6(%arg0: i32) -> (i32, i32) {
    %c0_i32 = arith.constant 0 : i32
    %c0_i32_0 = arith.constant 0 : i32
    %c0_i32_1 = arith.constant 0 : i32
    return %c0_i32, %c0_i32_0 : i32, i32
  }
  func.func @transform_7(%arg0: i32) -> (i32, i32) {
    %c0_i32 = arith.constant 0 : i32
    %c0_i32_0 = arith.constant 0 : i32
    %c0_i32_1 = arith.constant 0 : i32
    return %c0_i32, %c0_i32_0 : i32, i32
  }
  func.func @transform_8(%arg0: i32) -> (i32, i32) {
    %c0_i32 = arith.constant 0 : i32
    %c0_i32_0 = arith.constant 0 : i32
    %c0_i32_1 = arith.constant 0 : i32
    return %c0_i32, %c0_i32_0 : i32, i32
  }
  func.func @transform_9(%arg0: i32) -> (i32, i32) {
    %c0_i32 = arith.constant 0 : i32
    %c0_i32_0 = arith.constant 0 : i32
    return %arg0, %c0_i32 : i32, i32
  }
}

</mosaic_0001>

<llo_original>
// kernel: tpu_custom_call.1
$region0: #{tpu_custom_call.1}
  #allocation0 [shape = 'u32[]', space=smem, size = 0x4, offset = 0x4, fixed_abs, tag = 'smem constant byte address 0x4 - core index']
  #allocation1 [shape = 'u32[144,128]{1,0:T(1,128)}', space=vmem, size = 0x12000, scoped, tag = 'internal scratch']
  #allocation2 [shape = 'f32[1,1]{1,0:T(1,128)S(1)}', space=vmem, size = 0x200, scoped, tag = 'scoped memory for tpu_custom_call.1']
  %s0 = inlined_call_operand.vmem [shape: f32[2,16], index: 0, kind: input, shape index: {}]
  %s1 = inlined_call_operand.hbm [shape: f32[2,8], index: 1, kind: input, shape index: {}]
  %s2 = inlined_call_operand.hbm [shape: bf16[16,256], index: 2, kind: input, shape index: {}]
  %s3 = inlined_call_operand.hbm [shape: bf16[8,256], index: 3, kind: input, shape index: {}]
  %s4 = inlined_call_operand.vmem [shape: f32[1,256], index: 4, kind: input, shape index: {}]
  %s5 = inlined_call_operand.hbm [shape: bf16[256,256], index: 5, kind: input, shape index: {}]
  %s6 = inlined_call_operand.vmem [shape: f32[1,256], index: 6, kind: input, shape index: {}]
  %s7 = inlined_call_operand.vmem [shape: f32[1,256], index: 7, kind: input, shape index: {}]
  %s8 = inlined_call_operand.<no memory space> [shape: f32[1,1], index: 8, kind: input, shape index: {}]
  %s9 = inlined_call_operand.vmem [shape: f32[2,1], index: 9, kind: output, shape index: {}]
  %s10 = sld [smem:[#allocation0]]
  $region62: #{tpu_custom_call.1} parent=0
    _
  %s12 = ssub.s32 1, %s10
  %s13 = scalar_select 0, %s12, %s10
  %v14 = vstv %s8
  %15 = vst [vmem:[#allocation2] sm:$0x1] %v14
  $region1: #{tpu_custom_call.1} parent=0
    #allocation3 [shape = 'u8[1024]{0}', space=vmem, size = 0x400, scoped, tag = 'input window, operand 1, single buffered']
    #allocation4 [shape = 's32[1]{0}', space=sflag, size = 0x4, scoped, tag = 'scoped memory for tpu_custom_call.1']
    #allocation5 [shape = 'u8[8192]{0}', space=vmem, size = 0x2000, scoped, tag = 'input window, operand 2, single buffered']
    #allocation6 [shape = 's32[1]{0}', space=sflag, size = 0x4, scoped, tag = 'scoped memory for tpu_custom_call.1']
    #allocation7 [shape = 'u8[4096]{0}', space=vmem, size = 0x1000, scoped, tag = 'input window, operand 3, single buffered']
    #allocation8 [shape = 'u8[131072]{0}', space=vmem, size = 0x20000, scoped, tag = 'input window, operand 5, single buffered']
    #allocation9 [shape = 's32[1]{0}', space=sflag, size = 0x4, scoped, tag = 'scoped memory for tpu_custom_call.1']
    %16 = vsyncpa [#allocation4], 0
    %17 = vsyncpa [#allocation6], 0
    %18 = vsyncpa [#allocation9], 0
    // Predicated region
    $region2: #{tpu_custom_call.1} parent=1 // pred_check
      _
    $region3: #{tpu_custom_call.1} parent=1 // pred_check_branch
      %20 = sbr.rel (0) target = $region5
    $region4: #{tpu_custom_call.1} parent=1 // pred_region
      _
    $region5: #{tpu_custom_call.1} parent=1 // pred_fallthru
      _
    // Predicated region
    $region6: #{tpu_custom_call.1} parent=1 // pred_check
      _
    $region7: #{tpu_custom_call.1} parent=1 // pred_check_branch
      %22 = sbr.rel (0) target = $region9
    $region8: #{tpu_custom_call.1} parent=1 // pred_region
      %s24 = ssub.s32 32, 32
      %25 = vsyncadd [#allocation4], %s24
      %s27 = sshll.u32 [#allocation3], 4
      %s28 = int_to_ptr.vmem [resolvable:$true] %s27
      %30 = dma.hbm_to_vmem [thread:$0]  %s1, 32, %s28, [#allocation4]
    $region9: #{tpu_custom_call.1} parent=1 // pred_fallthru
      _
    // Predicated region
    $region10: #{tpu_custom_call.1} parent=1 // pred_check
      _
    $region11: #{tpu_custom_call.1} parent=1 // pred_check_branch
      %32 = sbr.rel (0) target = $region13
    $region12: #{tpu_custom_call.1} parent=1 // pred_region
      %s34 = ssub.s32 256, 256
      %35 = vsyncadd [#allocation6], %s34
      %s36 = sshll.u32 [#allocation5], 4
      %s37 = int_to_ptr.vmem [resolvable:$true] %s36
      %42 = dma.hbm_to_vmem [thread:$0]  %s2, 256, %s37, [#allocation6], 128, 128, 8
    $region13: #{tpu_custom_call.1} parent=1 // pred_fallthru
      _
    // Predicated region
    $region14: #{tpu_custom_call.1} parent=1 // pred_check
      _
    $region15: #{tpu_custom_call.1} parent=1 // pred_check_branch
      %44 = sbr.rel (0) target = $region17
    $region16: #{tpu_custom_call.1} parent=1 // pred_region
      %s46 = ssub.s32 128, 128
      %47 = vsyncadd [#allocation6], %s46
      %s49 = sshll.u32 [#allocation7], 4
      %s50 = int_to_ptr.vmem [resolvable:$true] %s49
      %52 = dma.hbm_to_vmem [thread:$0]  %s3, 128, %s50, [#allocation6]
    $region17: #{tpu_custom_call.1} parent=1 // pred_fallthru
      _
    // Predicated region
    $region18: #{tpu_custom_call.1} parent=1 // pred_check
      _
    $region19: #{tpu_custom_call.1} parent=1 // pred_check_branch
      %54 = sbr.rel (0) target = $region21
    $region20: #{tpu_custom_call.1} parent=1 // pred_region
      _
    $region21: #{tpu_custom_call.1} parent=1 // pred_fallthru
      _
    // Predicated region
    $region22: #{tpu_custom_call.1} parent=1 // pred_check
      _
    $region23: #{tpu_custom_call.1} parent=1 // pred_check_branch
      %56 = sbr.rel (0) target = $region25
    $region24: #{tpu_custom_call.1} parent=1 // pred_region
      %s58 = ssub.s32 4096, 4096
      %59 = vsyncadd [#allocation9], %s58
      %s60 = sshll.u32 [#allocation8], 4
      %s61 = int_to_ptr.vmem [resolvable:$true] %s60
      %66 = dma.hbm_to_vmem [thread:$0]  %s5, 4096, %s61, [#allocation9], 128, 128, 8
    $region25: #{tpu_custom_call.1} parent=1 // pred_fallthru
      _
    // Predicated region
    $region26: #{tpu_custom_call.1} parent=1 // pred_check
      _
    $region27: #{tpu_custom_call.1} parent=1 // pred_check_branch
      %68 = sbr.rel (0) target = $region29
    $region28: #{tpu_custom_call.1} parent=1 // pred_region
      _
    $region29: #{tpu_custom_call.1} parent=1 // pred_fallthru
      _
    // Predicated region
    $region30: #{tpu_custom_call.1} parent=1 // pred_check
      _
    $region31: #{tpu_custom_call.1} parent=1 // pred_check_branch
      %70 = sbr.rel (0) target = $region33
    $region32: #{tpu_custom_call.1} parent=1 // pred_region
      _
    $region33: #{tpu_custom_call.1} parent=1 // pred_fallthru
      _
    // Predicated region
    $region34: #{tpu_custom_call.1} parent=1 // pred_check
      _
    $region35: #{tpu_custom_call.1} parent=1 // pred_check_branch
      %72 = sbr.rel (0) target = $region37
    $region36: #{tpu_custom_call.1} parent=1 // pred_region
      _
    $region37: #{tpu_custom_call.1} parent=1 // pred_fallthru
      _
    // Predicated region
    $region38: #{tpu_custom_call.1} parent=1 // pred_check
      _
    $region39: #{tpu_custom_call.1} parent=1 // pred_check_branch
      %74 = sbr.rel (0) target = $region41
    $region40: #{tpu_custom_call.1} parent=1 // pred_region
      %75 = dma.done [#allocation4], 32
    $region41: #{tpu_custom_call.1} parent=1 // pred_fallthru
      _
    // Predicated region
    $region42: #{tpu_custom_call.1} parent=1 // pred_check
      _
    $region43: #{tpu_custom_call.1} parent=1 // pred_check_branch
      %77 = sbr.rel (0) target = $region45
    $region44: #{tpu_custom_call.1} parent=1 // pred_region
      %78 = dma.done [#allocation6], 256
    $region45: #{tpu_custom_call.1} parent=1 // pred_fallthru
      _
    // Predicated region
    $region46: #{tpu_custom_call.1} parent=1 // pred_check
      _
    $region47: #{tpu_custom_call.1} parent=1 // pred_check_branch
      %80 = sbr.rel (0) target = $region49
    $region48: #{tpu_custom_call.1} parent=1 // pred_region
      %81 = dma.done [#allocation6], 128
    $region49: #{tpu_custom_call.1} parent=1 // pred_fallthru
      _
    // Predicated region
    $region50: #{tpu_custom_call.1} parent=1 // pred_check
      _
    $region51: #{tpu_custom_call.1} parent=1 // pred_check_branch
      %83 = sbr.rel (0) target = $region53
    $region52: #{tpu_custom_call.1} parent=1 // pred_region
      %84 = dma.done [#allocation9], 4096
    $region53: #{tpu_custom_call.1} parent=1 // pred_fallthru
      _
    %v86 = vld [vmem:[%s0] sm:$0x3]
    %v87 = vpack.c.bf16 %v86, %v86
    %v88 = vld [vmem:[#allocation5] sm:$0xff]
    %v89 = vld [vmem:[#allocation5 + $0x8] sm:$0xff]
    %v90 = vld [vmem:[#allocation3] sm:$0x3]
    %v91 = vpack.c.bf16 %v90, %v90
    %v92 = vld [vmem:[#allocation7] sm:$0xff]
    %v94 = vunpack.c.l.b16 %v92
    %v95 = vunpack.c.h.b16 %v92
    %v96 = vpack.c.b16 %v94, %v94
    %v97 = vpack.c.b16 %v95, %v95
    %vm98 = vcmask 64512
    %v100 = vsel %vm98, %v91, 0
    %vm102 = vcmask 1043456
    %v104 = vsel %vm102, %v96, 0
    %v107 = vsel %vm102, %v97, 0
    %109 = vmatprep.subr.bf16.mxu0 0
    %110 = vmatpush1.bf16.msra.mxu0 0
    %111 = vmatprep.subr.bf16.mxu0 0
    %112 = vmatpush1.bf16.msra.mxu0 0
    %113 = vmatprep.subr.bf16.mxu0 0
    %114 = vmatpush1.bf16.msra.mxu0 0
    %115 = vmatprep.subr.bf16.mxu0 0
    %116 = vmatpush1.bf16.msra.mxu0 0
    %117 = vmatprep.subr.bf16.mxu0 0
    %118 = vmatpush1.bf16.msra.mxu0 0
    %119 = vmatprep.subr.bf16.mxu0 0
    %120 = vmatpush1.bf16.msra.mxu0 0
    %121 = vmatprep.subr.bf16.mxu0 0
    %122 = vmatpush1.bf16.msra.mxu0 0
    %123 = vmatprep.subr.bf16.mxu0 %v107
    %124 = vmatpush1.bf16.msra.mxu0 %v104
    %125 = vmatprep.subr.bf16.mxu0 0
    %126 = vmatpush2.bf16.msra.mxu0 0
    %127 = vmatprep.subr.bf16.mxu0 0
    %128 = vmatpush2.bf16.msra.mxu0 0
    %129 = vmatprep.subr.bf16.mxu0 0
    %130 = vmatpush2.bf16.msra.mxu0 0
    %131 = vmatprep.subr.bf16.mxu0 0
    %132 = vmatpush2.bf16.msra.mxu0 0
    %133 = vmatprep.subr.bf16.mxu0 0
    %134 = vmatpush2.bf16.msra.mxu0 0
    %135 = vmatprep.subr.bf16.mxu0 0
    %136 = vmatpush2.bf16.msra.mxu0 0
    %137 = vmatprep.subr.bf16.mxu0 0
    %138 = vmatpush2.bf16.msra.mxu0 0
    %139 = vmatprep.subr.bf16.mxu0 0
    %140 = vmatpush2.bf16.msra.mxu0 0
    %141 = vmatprep.mubr.bf16.mxu0 0
    %142 = vmatmul.mubr.bf16.gmra.mxu0 %v100
    %v143 = vpop.f32.mrf.mxu0
    %v144 = vadd.f32 0.0, %v143
    %v145 = vpop.f32.mrf.mxu0
    %v146 = vadd.f32 0.0, %v145
    %v147 = vpop.f32.mrf.mxu0
    %v148 = vpop.f32.mrf.mxu0
    %149 = vdwg.mxu0
    %v152 = vunpack.c.l.b16 %v88
    %v153 = vunpack.c.h.b16 %v88
    %v154 = vunpack.c.l.b16 %v89
    %v155 = vunpack.c.h.b16 %v89
    %v156 = vpack.c.b16 %v154, %v152
    %v157 = vpack.c.b16 %v155, %v153
    %vm160 = vcmask 130048
    %v162 = vsel %vm160, %v87, 0
    %164 = vmatprep.subr.bf16.mxu0 0
    %165 = vmatpush1.bf16.msra.mxu0 0
    %166 = vmatprep.subr.bf16.mxu0 0
    %167 = vmatpush1.bf16.msra.mxu0 0
    %168 = vmatprep.subr.bf16.mxu0 0
    %169 = vmatpush1.bf16.msra.mxu0 0
    %170 = vmatprep.subr.bf16.mxu0 0
    %171 = vmatpush1.bf16.msra.mxu0 0
    %172 = vmatprep.subr.bf16.mxu0 0
    %173 = vmatpush1.bf16.msra.mxu0 0
    %174 = vmatprep.subr.bf16.mxu0 0
    %175 = vmatpush1.bf16.msra.mxu0 0
    %176 = vmatprep.subr.bf16.mxu0 0
    %177 = vmatpush1.bf16.msra.mxu0 0
    %178 = vmatprep.subr.bf16.mxu0 %v157
    %179 = vmatpush1.bf16.msra.mxu0 %v156
    %180 = vmatprep.subr.bf16.mxu0 0
    %181 = vmatpush2.bf16.msra.mxu0 0
    %182 = vmatprep.subr.bf16.mxu0 0
    %183 = vmatpush2.bf16.msra.mxu0 0
    %184 = vmatprep.subr.bf16.mxu0 0
    %185 = vmatpush2.bf16.msra.mxu0 0
    %186 = vmatprep.subr.bf16.mxu0 0
    %187 = vmatpush2.bf16.msra.mxu0 0
    %188 = vmatprep.subr.bf16.mxu0 0
    %189 = vmatpush2.bf16.msra.mxu0 0
    %190 = vmatprep.subr.bf16.mxu0 0
    %191 = vmatpush2.bf16.msra.mxu0 0
    %192 = vmatprep.subr.bf16.mxu0 0
    %193 = vmatpush2.bf16.msra.mxu0 0
    %194 = vmatprep.subr.bf16.mxu0 0
    %195 = vmatpush2.bf16.msra.mxu0 0
    %196 = vmatprep.mubr.bf16.mxu0 0
    %197 = vmatmul.mubr.bf16.gmra.mxu0 %v162
    %v198 = vpop.f32.mrf.mxu0
    %v199 = vadd.f32 %v144, %v198
    %v200 = vpop.f32.mrf.mxu0
    %v201 = vadd.f32 %v146, %v200
    %v202 = vpop.f32.mrf.mxu0
    %v203 = vpop.f32.mrf.mxu0
    %204 = vdwg.mxu0
    %v205 = vld [vmem:[%s4] sm:$0x3]
    %v207 = vlaneseq
    %v208 = vshrl.u32 %v207, 7
    %v209 = vsub.s32 0, %v208
    %v210 = vrot.slane %v205, %v209
    %v211 = vlaneseq
    %v212 = vshrl.u32 %v211, 7
    %v213 = vsub.s32 1, %v212
    %v214 = vrot.slane %v205, %v213
    %v217 = vadd.f32 %v199, %v210
    %v218 = vadd.f32 %v201, %v214
    %v219 = vmax.f32 %v217, 0.0
    %v220 = vmax.f32 %v218, 0.0
    %v221 = vpack.c.bf16 %v219, %v219
    %v222 = vpack.c.bf16 %v220, %v220
    %v223 = vld [vmem:[#allocation8] sm:$0xff]
    %v224 = vld [vmem:[#allocation8 + $0x8] sm:$0xff]
    %v225 = vld [vmem:[#allocation8 + $0x10] sm:$0xff]
    %v226 = vld [vmem:[#allocation8 + $0x18] sm:$0xff]
    %v227 = vld [vmem:[#allocation8 + $0x20] sm:$0xff]
    %v228 = vld [vmem:[#allocation8 + $0x28] sm:$0xff]
    %v229 = vld [vmem:[#allocation8 + $0x30] sm:$0xff]
    %v230 = vld [vmem:[#allocation8 + $0x38] sm:$0xff]
    %v231 = vld [vmem:[#allocation8 + $0x40] sm:$0xff]
    %v232 = vld [vmem:[#allocation8 + $0x48] sm:$0xff]
    %v233 = vld [vmem:[#allocation8 + $0x50] sm:$0xff]
    %v234 = vld [vmem:[#allocation8 + $0x58] sm:$0xff]
    %v235 = vld [vmem:[#allocation8 + $0x60] sm:$0xff]
    %v236 = vld [vmem:[#allocation8 + $0x68] sm:$0xff]
    %v237 = vld [vmem:[#allocation8 + $0x70] sm:$0xff]
    %v238 = vld [vmem:[#allocation8 + $0x78] sm:$0xff]
    %v239 = vld [vmem:[#allocation8 + $0x80] sm:$0xff]
    %v240 = vld [vmem:[#allocation8 + $0x88] sm:$0xff]
    %v241 = vld [vmem:[#allocation8 + $0x90] sm:$0xff]
    %v242 = vld [vmem:[#allocation8 + $0x98] sm:$0xff]
    %v243 = vld [vmem:[#allocation8 + $0xa0] sm:$0xff]
    %v244 = vld [vmem:[#allocation8 + $0xa8] sm:$0xff]
    %v245 = vld [vmem:[#allocation8 + $0xb0] sm:$0xff]
    %v246 = vld [vmem:[#allocation8 + $0xb8] sm:$0xff]
    %v247 = vld [vmem:[#allocation8 + $0xc0] sm:$0xff]
    %v248 = vld [vmem:[#allocation8 + $0xc8] sm:$0xff]
    %v249 = vld [vmem:[#allocation8 + $0xd0] sm:$0xff]
    %v250 = vld [vmem:[#allocation8 + $0xd8] sm:$0xff]
    %v251 = vld [vmem:[#allocation8 + $0xe0] sm:$0xff]
    %v252 = vld [vmem:[#allocation8 + $0xe8] sm:$0xff]
    %v253 = vld [vmem:[#allocation8 + $0xf0] sm:$0xff]
    %v254 = vld [vmem:[#allocation8 + $0xf8] sm:$0xff]
    %v255 = vld [vmem:[%s6] sm:$0x3]
    %v257 = vlaneseq
    %v258 = vshrl.u32 %v257, 7
    %v259 = vsub.s32 0, %v258
    %v260 = vrot.slane %v255, %v259
    %v261 = vlaneseq
    %v262 = vshrl.u32 %v261, 7
    %v263 = vsub.s32 1, %v262
    %v264 = vrot.slane %v255, %v263
    %v299 = vunpack.c.l.b16 %v223
    %v300 = vunpack.c.h.b16 %v223
    %v301 = vunpack.c.l.b16 %v224
    %v302 = vunpack.c.h.b16 %v224
    %v303 = vunpack.c.l.b16 %v225
    %v304 = vunpack.c.h.b16 %v225
    %v305 = vunpack.c.l.b16 %v226
    %v306 = vunpack.c.h.b16 %v226
    %v307 = vunpack.c.l.b16 %v227
    %v308 = vunpack.c.h.b16 %v227
    %v309 = vunpack.c.l.b16 %v228
    %v310 = vunpack.c.h.b16 %v228
    %v311 = vunpack.c.l.b16 %v229
    %v312 = vunpack.c.h.b16 %v229
    %v313 = vunpack.c.l.b16 %v230
    %v314 = vunpack.c.h.b16 %v230
    %v315 = vunpack.c.l.b16 %v231
    %v316 = vunpack.c.h.b16 %v231
    %v317 = vunpack.c.l.b16 %v232
    %v318 = vunpack.c.h.b16 %v232
    %v319 = vunpack.c.l.b16 %v233
    %v320 = vunpack.c.h.b16 %v233
    %v321 = vunpack.c.l.b16 %v234
    %v322 = vunpack.c.h.b16 %v234
    %v323 = vunpack.c.l.b16 %v235
    %v324 = vunpack.c.h.b16 %v235
    %v325 = vunpack.c.l.b16 %v236
    %v326 = vunpack.c.h.b16 %v236
    %v327 = vunpack.c.l.b16 %v237
    %v328 = vunpack.c.h.b16 %v237
    %v329 = vunpack.c.l.b16 %v238
    %v330 = vunpack.c.h.b16 %v238
    %v331 = vunpack.c.l.b16 %v239
    %v332 = vunpack.c.h.b16 %v239
    %v333 = vunpack.c.l.b16 %v240
    %v334 = vunpack.c.h.b16 %v240
    %v335 = vunpack.c.l.b16 %v241
    %v336 = vunpack.c.h.b16 %v241
    %v337 = vunpack.c.l.b16 %v242
    %v338 = vunpack.c.h.b16 %v242
    %v339 = vunpack.c.l.b16 %v243
    %v340 = vunpack.c.h.b16 %v243
    %v341 = vunpack.c.l.b16 %v244
    %v342 = vunpack.c.h.b16 %v244
    %v343 = vunpack.c.l.b16 %v245
    %v344 = vunpack.c.h.b16 %v245
    %v345 = vunpack.c.l.b16 %v246
    %v346 = vunpack.c.h.b16 %v246
    %v347 = vunpack.c.l.b16 %v247
    %v348 = vunpack.c.h.b16 %v247
    %v349 = vunpack.c.l.b16 %v248
    %v350 = vunpack.c.h.b16 %v248
    %v351 = vunpack.c.l.b16 %v249
    %v352 = vunpack.c.h.b16 %v249
    %v353 = vunpack.c.l.b16 %v250
    %v354 = vunpack.c.h.b16 %v250
    %v355 = vunpack.c.l.b16 %v251
    %v356 = vunpack.c.h.b16 %v251
    %v357 = vunpack.c.l.b16 %v252
    %v358 = vunpack.c.h.b16 %v252
    %v359 = vunpack.c.l.b16 %v253
    %v360 = vunpack.c.h.b16 %v253
    %v361 = vunpack.c.l.b16 %v254
    %v362 = vunpack.c.h.b16 %v254
    %v363 = vpack.c.b16 %v301, %v299
    %v364 = vpack.c.b16 %v302, %v300
    %v365 = vpack.c.b16 %v305, %v303
    %v366 = vpack.c.b16 %v306, %v304
    %v367 = vpack.c.b16 %v309, %v307
    %v368 = vpack.c.b16 %v310, %v308
    %v369 = vpack.c.b16 %v313, %v311
    %v370 = vpack.c.b16 %v314, %v312
    %v371 = vpack.c.b16 %v317, %v315
    %v372 = vpack.c.b16 %v318, %v316
    %v373 = vpack.c.b16 %v321, %v319
    %v374 = vpack.c.b16 %v322, %v320
    %v375 = vpack.c.b16 %v325, %v323
    %v376 = vpack.c.b16 %v326, %v324
    %v377 = vpack.c.b16 %v329, %v327
    %v378 = vpack.c.b16 %v330, %v328
    %v379 = vpack.c.b16 %v333, %v331
    %v380 = vpack.c.b16 %v334, %v332
    %v381 = vpack.c.b16 %v337, %v335
    %v382 = vpack.c.b16 %v338, %v336
    %v383 = vpack.c.b16 %v341, %v339
    %v384 = vpack.c.b16 %v342, %v340
    %v385 = vpack.c.b16 %v345, %v343
    %v386 = vpack.c.b16 %v346, %v344
    %v387 = vpack.c.b16 %v349, %v347
    %v388 = vpack.c.b16 %v350, %v348
    %v389 = vpack.c.b16 %v353, %v351
    %v390 = vpack.c.b16 %v354, %v352
    %v391 = vpack.c.b16 %v357, %v355
    %v392 = vpack.c.b16 %v358, %v356
    %v393 = vpack.c.b16 %v361, %v359
    %v394 = vpack.c.b16 %v362, %v360
    %427 = vmatprep.subr.bf16.mxu0 %v378
    %428 = vmatpush1.bf16.msra.mxu0 %v377
    %429 = vmatprep.subr.bf16.mxu0 %v376
    %430 = vmatpush1.bf16.msra.mxu0 %v375
    %431 = vmatprep.subr.bf16.mxu0 %v374
    %432 = vmatpush1.bf16.msra.mxu0 %v373
    %433 = vmatprep.subr.bf16.mxu0 %v372
    %434 = vmatpush1.bf16.msra.mxu0 %v371
    %435 = vmatprep.subr.bf16.mxu0 %v370
    %436 = vmatpush1.bf16.msra.mxu0 %v369
    %437 = vmatprep.subr.bf16.mxu0 %v368
    %438 = vmatpush1.bf16.msra.mxu0 %v367
    %439 = vmatprep.subr.bf16.mxu0 %v366
    %440 = vmatpush1.bf16.msra.mxu0 %v365
    %441 = vmatprep.subr.bf16.mxu0 %v364
    %442 = vmatpush1.bf16.msra.mxu0 %v363
    %443 = vmatprep.subr.bf16.mxu0 %v394
    %444 = vmatpush2.bf16.msra.mxu0 %v393
    %445 = vmatprep.subr.bf16.mxu0 %v392
    %446 = vmatpush2.bf16.msra.mxu0 %v391
    %447 = vmatprep.subr.bf16.mxu0 %v390
    %448 = vmatpush2.bf16.msra.mxu0 %v389
    %449 = vmatprep.subr.bf16.mxu0 %v388
    %450 = vmatpush2.bf16.msra.mxu0 %v387
    %451 = vmatprep.subr.bf16.mxu0 %v386
    %452 = vmatpush2.bf16.msra.mxu0 %v385
    %453 = vmatprep.subr.bf16.mxu0 %v384
    %454 = vmatpush2.bf16.msra.mxu0 %v383
    %455 = vmatprep.subr.bf16.mxu0 %v382
    %456 = vmatpush2.bf16.msra.mxu0 %v381
    %457 = vmatprep.subr.bf16.mxu0 %v380
    %458 = vmatpush2.bf16.msra.mxu0 %v379
    %459 = vmatprep.mubr.bf16.mxu0 %v222
    %460 = vmatmul.mubr.bf16.gmra.mxu0 %v221
    %v461 = vpop.f32.mrf.mxu0
    %v462 = vadd.f32 %v260, %v461
    %v463 = vpop.f32.mrf.mxu0
    %v464 = vadd.f32 %v264, %v463
    %v465 = vpop.f32.mrf.mxu0
    %v466 = vpop.f32.mrf.mxu0
    %467 = vdwg.mxu0
    %v468 = vmax.f32 %v462, 0.0
    %v469 = vmax.f32 %v464, 0.0
    %v470 = vld [vmem:[%s7] sm:$0x3]
    %v472 = vlaneseq
    %v473 = vshrl.u32 %v472, 7
    %v474 = vsub.s32 0, %v473
    %v475 = vrot.slane %v470, %v474
    %v476 = vlaneseq
    %v477 = vshrl.u32 %v476, 7
    %v478 = vsub.s32 1, %v477
    %v479 = vrot.slane %v470, %v478
    %v482 = vmul.f32 %v468, %v475
    %v483 = vmul.f32 %v469, %v479
    %vm484 = vcmask 1041408
    %v485 = vsel %vm484, %v482, 0.0
    %v486 = vsel %vm484, %v483, 0.0
    %v487 = vadd.f32 %v485, %v486
    %488 = vadd.xlane.f32.xlu0 %v487
    %v489 = vpop.xlane.xlu0 %488
    %v490 = vld [vmem:[#allocation2] sm:$0x1]
    %v492 = vlaneseq
    %v493 = vshrl.u32 %v492, 7
    %v494 = vsub.s32 0, %v493
    %v495 = vrot.slane %v490, %v494
    %v497 = vadd.f32 %v489, %v495
    %vm498 = vcmask 1024
    %499 = vst.msk [vmem:[%s9] sm:$0x3] %vm498, %v497
    // Predicated region
    $region54: #{tpu_custom_call.1} parent=1 // pred_check
      _
    $region55: #{tpu_custom_call.1} parent=1 // pred_check_branch
      %501 = sbr.rel (0) target = $region57
    $region56: #{tpu_custom_call.1} parent=1 // pred_region
      _
    $region57: #{tpu_custom_call.1} parent=1 // pred_fallthru
      _
    // Predicated region
    $region58: #{tpu_custom_call.1} parent=1 // pred_check
      _
    $region59: #{tpu_custom_call.1} parent=1 // pred_check_branch
      %503 = sbr.rel (0) target = $region61
    $region60: #{tpu_custom_call.1} parent=1 // pred_region
      _
    $region61: #{tpu_custom_call.1} parent=1 // pred_fallthru
      _
    %504 = vsyncpa [#allocation4], 1
    %505 = vsyncpa [#allocation6], 1
    %506 = vsyncpa [#allocation9], 1

</llo_original>
